<compile_context>
chip_gen: v5e
topology: v5e:2x2
jax: 0.10.0
libtpu: 0.0.40
codegen_flags: <defaults>
</compile_context>

<pallas_src>
import functools

import jax
import jax.numpy as jnp
from jax.experimental import pallas as pl
from jax.experimental.pallas import tpu as pltpu

HIDDEN = 50
SUBLANE = 8


def _round_up(x, m):
    return (x + m - 1) // m * m


def _mlp_kernel(x_ref, w1_ref, b1_ref, w2_ref, b2_ref, o_ref, *, compute_dtype):
    # x_ref : (bm, in)        w1_ref: (in, hid)    b1_ref: (1, hid)  f32
    # w2_ref: (hid, out)      b2_ref: (1, out) f32 o_ref : (bm, out) f32
    x = x_ref[...].astype(compute_dtype)  # in-kernel cast only (no wrapper pass)
    h = jnp.tanh(
        jnp.dot(x, w1_ref[...], preferred_element_type=jnp.float32) + b1_ref[...]
    )
    logits = (
        jnp.dot(h.astype(w2_ref.dtype), w2_ref[...],
                preferred_element_type=jnp.float32)
        + b2_ref[...]
    )
    # Numerically stable softmax over the real (unpadded) output lanes.
    m = jnp.max(logits, axis=-1, keepdims=True)
    e = jnp.exp(logits - m)
    denom = jnp.sum(e, axis=-1, keepdims=True)
    o_ref[...] = (e / denom).astype(o_ref.dtype)  # exact normalization (sum == 1)


def mlp_forward(x, w1, b1, w2, b2, *, bm=None, compute_dtype=jnp.float32):
    """Rows of x -> Linear(in,50) -> Tanh -> Linear(50,out) -> Softmax(dim=-1).

    Weights are (in_features, out_features), i.e. transposed vs. PyTorch nn.Linear.
    """
    batch, input_dim = x.shape
    hidden = w1.shape[1]
    output_dim = w2.shape[1]

    # Weights / biases are tiny: one-time wrapper casts are negligible.
    # x itself is streamed untouched — no pad / cast / copy pass over it.
    w1c = w1.astype(compute_dtype)
    w2c = w2.astype(compute_dtype)
    b1c = b1.reshape(1, hidden).astype(jnp.float32)
    b2c = b2.reshape(1, output_dim).astype(jnp.float32)

    if bm is None:
        if batch <= SUBLANE:
            bm = batch  # single block equal to the full batch dim (legal)
        else:
            dsize = jnp.dtype(x.dtype).itemsize
            # Double-buffered x + out tiles; keep them well under default scoped
            # VMEM on every generation (v5e 16 MiB default included).
            per_row = 2 * (input_dim * dsize + output_dim * 4)
            vmem_cap = max(SUBLANE, (8 * 1024 * 1024) // max(per_row, 1))
            bm = min(4096, vmem_cap, batch)
            # Keep >= 2 grid steps so dimension_semantics=("parallel",) can feed
            # both TensorCores on v7x.
            bm = min(bm, _round_up(pl.cdiv(batch, 2), SUBLANE))
            bm = max(SUBLANE, (bm // SUBLANE) * SUBLANE)
    grid = (pl.cdiv(batch, bm),)

    kernel = functools.partial(_mlp_kernel, compute_dtype=compute_dtype)

    out = pl.pallas_call(
        kernel,
        out_shape=jax.ShapeDtypeStruct((batch, output_dim), jnp.float32),
        grid_spec=pl.GridSpec(
            grid=grid,
            in_specs=[
                # x tile: last dim == full input_dim (legal, no lane padding copy).
                pl.BlockSpec((bm, input_dim), lambda i: (i, 0)),
                # Grid-invariant weights/biases at natural shapes (block == array).
                pl.BlockSpec((input_dim, hidden), lambda i: (0, 0)),
                pl.BlockSpec((1, hidden), lambda i: (0, 0)),
                pl.BlockSpec((hidden, output_dim), lambda i: (0, 0)),
                pl.BlockSpec((1, output_dim), lambda i: (0, 0)),
            ],
            # Narrow output writeback: (bm, output_dim), no 128-lane slab, no
            # wrapper-side slice pass.
            out_specs=pl.BlockSpec((bm, output_dim), lambda i: (i, 0)),
        ),
        compiler_params=pltpu.CompilerParams(
            dimension_semantics=("parallel",),
        ),
    )(x, w1c, b1c, w2c, b2c)
    return out


def init_params(key, input_dim, output_dim):
    """Deterministic init mimicking PyTorch nn.Linear (uniform +/- 1/sqrt(fan_in))."""
    k1, k2, k3, k4 = jax.random.split(key, 4)
    bound1 = 1.0 / jnp.sqrt(input_dim)
    bound2 = 1.0 / jnp.sqrt(HIDDEN)
    w1 = jax.random.uniform(k1, (input_dim, HIDDEN), jnp.float32, -bound1, bound1)
    b1 = jax.random.uniform(k2, (1, HIDDEN), jnp.float32, -bound1, bound1)
    w2 = jax.random.uniform(k3, (HIDDEN, output_dim), jnp.float32, -bound2, bound2)
    b2 = jax.random.uniform(k4, (1, output_dim), jnp.float32, -bound2, bound2)
    return w1, b1, w2, b2


if __name__ == "__main__":
    key = jax.random.PRNGKey(0)
    kx, kp = jax.random.split(key)

    batch, input_dim, output_dim = 256, 32, 10
    x = jax.random.normal(kx, (batch, input_dim), jnp.float32)
    w1, b1, w2, b2 = init_params(kp, input_dim, output_dim)

    # batch=256 -> bm=128, 2 grid steps (both v7x TensorCores busy).
    out = jax.block_until_ready(mlp_forward(x, w1, b1, w2, b2))

    ref = jax.nn.softmax(jnp.tanh(x @ w1 + b1) @ w2 + b2, axis=-1)
    assert out.shape == (batch, output_dim)
    assert jnp.allclose(out, ref, atol=2e-3, rtol=2e-3)
    assert jnp.allclose(jnp.sum(out, axis=-1), 1.0, atol=1e-4)

    # Ragged batch: exercises the partial final block (no batch-padding copy).
    xb = jax.random.normal(kx, (37, input_dim), jnp.float32)
    outb = jax.block_until_ready(mlp_forward(xb, w1, b1, w2, b2))
    refb = jax.nn.softmax(jnp.tanh(xb @ w1 + b1) @ w2 + b2, axis=-1)
    assert outb.shape == (37, output_dim)
    assert jnp.allclose(outb, refb, atol=2e-3, rtol=2e-3)
    assert jnp.allclose(jnp.sum(outb, axis=-1), 1.0, atol=1e-4)

    print("KERNEL_OK")
</pallas_src>

<mosaic_0001>
module attributes {stable_mosaic.version = 11 : i64} {
  func.func @_mlp_kernel(%arg0: i32, %arg1: memref<128x32xf32, #tpu.memory_space<vmem>>, %arg2: memref<32x50xf32, #tpu.memory_space<vmem>>, %arg3: memref<1x50xf32, #tpu.memory_space<vmem>>, %arg4: memref<50x10xf32, #tpu.memory_space<vmem>>, %arg5: memref<1x10xf32, #tpu.memory_space<vmem>>, %arg6: memref<128x10xf32, #tpu.memory_space<vmem>>) attributes {dimension_semantics = [#tpu.dimension_semantics<parallel>], iteration_bounds = array<i64: 2>, scalar_prefetch = 0 : i64, scratch_operands = 0 : i64, tpu.core_type = #tpu.core_type<tc>, window_params = [{transform_indices = @transform_0, window_bounds = array<i64: 128, 32>}, {pipeline_mode = #tpu.pipeline_mode<synchronous>, transform_indices = @transform_1, window_bounds = array<i64: 32, 50>}, {pipeline_mode = #tpu.pipeline_mode<synchronous>, transform_indices = @transform_2, window_bounds = array<i64: 1, 50>}, {pipeline_mode = #tpu.pipeline_mode<synchronous>, transform_indices = @transform_3, window_bounds = array<i64: 50, 10>}, {pipeline_mode = #tpu.pipeline_mode<synchronous>, transform_indices = @transform_4, window_bounds = array<i64: 1, 10>}, {transform_indices = @transform_5, window_bounds = array<i64: 128, 10>}]} {
    %c0 = arith.constant 0 : index
    %c0_0 = arith.constant 0 : index
    %0 = vector.load %arg1[%c0, %c0_0] : memref<128x32xf32, #tpu.memory_space<vmem>>, vector<128x32xf32>
    %c0_1 = arith.constant 0 : index
    %c0_2 = arith.constant 0 : index
    %1 = vector.load %arg2[%c0_1, %c0_2] : memref<32x50xf32, #tpu.memory_space<vmem>>, vector<32x50xf32>
    %cst = arith.constant dense<0.000000e+00> : vector<128x50xf32>
    %2 = tpu.matmul %0, %1, %cst {dimension_numbers = #tpu.dot_dimension_numbers<[1], [0], [0], [1], [0, 0, 1, 1], [], []>} : vector<128x32xf32>, vector<32x50xf32>, vector<128x50xf32> -> vector<128x50xf32>
    %c0_3 = arith.constant 0 : index
    %c0_4 = arith.constant 0 : index
    %3 = vector.load %arg3[%c0_3, %c0_4] : memref<1x50xf32, #tpu.memory_space<vmem>>, vector<1x50xf32>
    %4 = vector.broadcast %3 : vector<1x50xf32> to vector<128x50xf32>
    %5 = arith.addf %2, %4 : vector<128x50xf32>
    %6 = math.tanh %5 : vector<128x50xf32>
    %c0_5 = arith.constant 0 : index
    %c0_6 = arith.constant 0 : index
    %7 = vector.load %arg4[%c0_5, %c0_6] : memref<50x10xf32, #tpu.memory_space<vmem>>, vector<50x10xf32>
    %cst_7 = arith.constant dense<0.000000e+00> : vector<128x10xf32>
    %8 = tpu.matmul %6, %7, %cst_7 {dimension_numbers = #tpu.dot_dimension_numbers<[1], [0], [0], [1], [0, 0, 1, 1], [], []>} : vector<128x50xf32>, vector<50x10xf32>, vector<128x10xf32> -> vector<128x10xf32>
    %c0_8 = arith.constant 0 : index
    %c0_9 = arith.constant 0 : index
    %9 = vector.load %arg5[%c0_8, %c0_9] : memref<1x10xf32, #tpu.memory_space<vmem>>, vector<1x10xf32>
    %10 = vector.broadcast %9 : vector<1x10xf32> to vector<128x10xf32>
    %11 = arith.addf %8, %10 : vector<128x10xf32>
    %cst_10 = arith.constant dense<0xFF800000> : vector<128xf32>
    %12 = vector.multi_reduction <maximumf>, %11, %cst_10 [1] : vector<128x10xf32> to vector<128xf32>
    %13 = vector.shape_cast %12 : vector<128xf32> to vector<128x1xf32>
    %14 = vector.broadcast %13 : vector<128x1xf32> to vector<128x10xf32>
    %15 = arith.subf %11, %14 : vector<128x10xf32>
    %16 = math.exp %15 : vector<128x10xf32>
    %cst_11 = arith.constant dense<0.000000e+00> : vector<128xf32>
    %17 = vector.multi_reduction <add>, %16, %cst_11 [1] : vector<128x10xf32> to vector<128xf32>
    %18 = vector.shape_cast %17 : vector<128xf32> to vector<128x1xf32>
    %19 = vector.broadcast %18 : vector<128x1xf32> to vector<128x10xf32>
    %20 = arith.divf %16, %19 : vector<128x10xf32>
    %c0_12 = arith.constant 0 : index
    %c0_13 = arith.constant 0 : index
    %21 = vector.load %arg6[%c0_12, %c0_13] : memref<128x10xf32, #tpu.memory_space<vmem>>, vector<128x10xf32>
    tpu.vector_store %arg6[%c0_12, %c0_13], %20 {strides = array<i32>} : memref<128x10xf32, #tpu.memory_space<vmem>>, vector<128x10xf32>,
    return
  }
  func.func @transform_0(%arg0: i32) -> (i32, i32) {
    %c0_i32 = arith.constant 0 : i32
    %c0_i32_0 = arith.constant 0 : i32
    return %arg0, %c0_i32 : i32, i32
  }
  func.func @transform_1(%arg0: i32) -> (i32, i32) {
    %c0_i32 = arith.constant 0 : i32
    %c0_i32_0 = arith.constant 0 : i32
    %c0_i32_1 = arith.constant 0 : i32
    return %c0_i32, %c0_i32_0 : i32, i32
  }
  func.func @transform_2(%arg0: i32) -> (i32, i32) {
    %c0_i32 = arith.constant 0 : i32
    %c0_i32_0 = arith.constant 0 : i32
    %c0_i32_1 = arith.constant 0 : i32
    return %c0_i32, %c0_i32_0 : i32, i32
  }
  func.func @transform_3(%arg0: i32) -> (i32, i32) {
    %c0_i32 = arith.constant 0 : i32
    %c0_i32_0 = arith.constant 0 : i32
    %c0_i32_1 = arith.constant 0 : i32
    return %c0_i32, %c0_i32_0 : i32, i32
  }
  func.func @transform_4(%arg0: i32) -> (i32, i32) {
    %c0_i32 = arith.constant 0 : i32
    %c0_i32_0 = arith.constant 0 : i32
    %c0_i32_1 = arith.constant 0 : i32
    return %c0_i32, %c0_i32_0 : i32, i32
  }
  func.func @transform_5(%arg0: i32) -> (i32, i32) {
    %c0_i32 = arith.constant 0 : i32
    %c0_i32_0 = arith.constant 0 : i32
    return %arg0, %c0_i32 : i32, i32
  }
}

</mosaic_0001>

<llo_original>
// kernel: tpu_custom_call.1
$region0: #{tpu_custom_call.1}
  #allocation0 [shape = 'u32[]', space=smem, size = 0x4, offset = 0x4, fixed_abs, tag = 'smem constant byte address 0x4 - core index']
  #allocation1 [shape = 'u32[72,128]{1,0:T(1,128)}', space=vmem, size = 0x9000, scoped, tag = 'internal scratch']
  %s0 = inlined_call_operand.vmem [shape: f32[256,32], index: 0, kind: input, shape index: {}]
  %s1 = inlined_call_operand.vmem [shape: f32[32,50], index: 1, kind: input, shape index: {}]
  %s2 = inlined_call_operand.vmem [shape: f32[1,50], index: 2, kind: input, shape index: {}]
  %s3 = inlined_call_operand.vmem [shape: f32[50,10], index: 3, kind: input, shape index: {}]
  %s4 = inlined_call_operand.vmem [shape: f32[1,10], index: 4, kind: input, shape index: {}]
  %s5 = inlined_call_operand.vmem [shape: f32[256,10], index: 5, kind: output, shape index: {}]
  %s6 = sld [smem:[#allocation0]]
  $region53: #{tpu_custom_call.1} parent=0
    _
  %s8 = ssub.s32 1, %s6
  %s9 = scalar_select 0, %s8, %s6
  loop: start=0, step=1, limit=4
  $region2: #{tpu_custom_call.1} parent=0 // loop_pre_header
    _
  $region3: #{tpu_custom_call.1} parent=0 // loop_header
    %s11 = sphi 0, %s15
    %p12 = scmp.ge.s32.totalorder %s11, 4
    %s21 = sphi 0, %s23
    %s24 = sphi 0, %s21
    %s25 = sphi 0, %s24
    %s41 = sphi 0, %s25
    %s45 = sphi 0, %s45
    %s47 = sphi 0, %s45
    %s48 = sphi 0, %s47
    %s62 = sphi 0, %s48
    %s66 = sphi 0, %s66
    %s68 = sphi 0, %s66
    %s69 = sphi 0, %s68
    %s83 = sphi 0, %s69
    %s87 = sphi 0, %s87
    %s89 = sphi 0, %s87
    %s90 = sphi 0, %s89
    %s104 = sphi 0, %s90
    %s108 = sphi 0, %s108
    %s110 = sphi 0, %s108
    %s111 = sphi 0, %s110
    %s125 = sphi 0, %s111
    %s131 = sphi 0, %s133
    %s134 = sphi 0, %s131
    %s135 = sphi 0, %s134
    %s151 = sphi 0, %s135
  $region4: #{tpu_custom_call.1} parent=0 // loop_header_branch
    %14 = sbr.rel (%p12) target = $region8
  $region5: #{tpu_custom_call.1} parent=0 // loop_body
    %s16 = ssub.s32 %s11, 1
    %s17 = ssub.s32 %s11, 2
    %s18 = sadd.s32 %s11, 1
    %s19 = ssub.s32 %s11, %s18
    %p20 = scmp.eq.s32.totalorder %s19, 0
    %s22 = sadd.s32 %s21, 1
    %s23 = scalar_select %p20, %s21, %s22
    %p26 = pneg %p20
    %p27 = scmp.eq.s32.totalorder %s11, 1
    %p28 = por %p26, %p27
    %p29 = scmp.ne.s32.totalorder %s21, %s24
    %p30 = scmp.eq.s32.totalorder %s11, 0
    %p31 = por %p29, %p30
    %p32 = scmp.ne.s32.totalorder %s21, %s24
    %p33 = scmp.eq.s32.totalorder %s16, 1
    %p34 = por %p32, %p33
    %p35 = scmp.ne.s32.totalorder %s24, %s25
    %p36 = scmp.eq.s32.totalorder %s16, 0
    %p37 = por %p35, %p36
    %p38 = scmp.ne.s32.totalorder %s24, %s25
    %p39 = scmp.eq.s32.totalorder %s17, 1
    %p40 = por %p38, %p39
    %p42 = scmp.ne.s32.totalorder %s25, %s41
    %p43 = scmp.eq.s32.totalorder %s17, 0
    %p44 = por %p42, %p43
    %s46 = sadd.s32 %s45, 1
    %p49 = scmp.eq.s32.totalorder %s11, 1
    %p50 = scmp.ne.s32.totalorder %s45, %s47
    %p51 = scmp.eq.s32.totalorder %s11, 0
    %p52 = por %p50, %p51
    %p53 = scmp.ne.s32.totalorder %s45, %s47
    %p54 = scmp.eq.s32.totalorder %s16, 1
    %p55 = por %p53, %p54
    %p56 = scmp.ne.s32.totalorder %s47, %s48
    %p57 = scmp.eq.s32.totalorder %s16, 0
    %p58 = por %p56, %p57
    %p59 = scmp.ne.s32.totalorder %s47, %s48
    %p60 = scmp.eq.s32.totalorder %s17, 1
    %p61 = por %p59, %p60
    %p63 = scmp.ne.s32.totalorder %s48, %s62
    %p64 = scmp.eq.s32.totalorder %s17, 0
    %p65 = por %p63, %p64
    %s67 = sadd.s32 %s66, 1
    %p70 = scmp.eq.s32.totalorder %s11, 1
    %p71 = scmp.ne.s32.totalorder %s66, %s68
    %p72 = scmp.eq.s32.totalorder %s11, 0
    %p73 = por %p71, %p72
    %p74 = scmp.ne.s32.totalorder %s66, %s68
    %p75 = scmp.eq.s32.totalorder %s16, 1
    %p76 = por %p74, %p75
    %p77 = scmp.ne.s32.totalorder %s68, %s69
    %p78 = scmp.eq.s32.totalorder %s16, 0
    %p79 = por %p77, %p78
    %p80 = scmp.ne.s32.totalorder %s68, %s69
    %p81 = scmp.eq.s32.totalorder %s17, 1
    %p82 = por %p80, %p81
    %p84 = scmp.ne.s32.totalorder %s69, %s83
    %p85 = scmp.eq.s32.totalorder %s17, 0
    %p86 = por %p84, %p85
    %s88 = sadd.s32 %s87, 1
    %p91 = scmp.eq.s32.totalorder %s11, 1
    %p92 = scmp.ne.s32.totalorder %s87, %s89
    %p93 = scmp.eq.s32.totalorder %s11, 0
    %p94 = por %p92, %p93
    %p95 = scmp.ne.s32.totalorder %s87, %s89
    %p96 = scmp.eq.s32.totalorder %s16, 1
    %p97 = por %p95, %p96
    %p98 = scmp.ne.s32.totalorder %s89, %s90
    %p99 = scmp.eq.s32.totalorder %s16, 0
    %p100 = por %p98, %p99
    %p101 = scmp.ne.s32.totalorder %s89, %s90
    %p102 = scmp.eq.s32.totalorder %s17, 1
    %p103 = por %p101, %p102
    %p105 = scmp.ne.s32.totalorder %s90, %s104
    %p106 = scmp.eq.s32.totalorder %s17, 0
    %p107 = por %p105, %p106
    %s109 = sadd.s32 %s108, 1
    %p112 = scmp.eq.s32.totalorder %s11, 1
    %p113 = scmp.ne.s32.totalorder %s108, %s110
    %p114 = scmp.eq.s32.totalorder %s11, 0
    %p115 = por %p113, %p114
    %p116 = scmp.ne.s32.totalorder %s108, %s110
    %p117 = scmp.eq.s32.totalorder %s16, 1
    %p118 = por %p116, %p117
    %p119 = scmp.ne.s32.totalorder %s110, %s111
    %p120 = scmp.eq.s32.totalorder %s16, 0
    %p121 = por %p119, %p120
    %p122 = scmp.ne.s32.totalorder %s110, %s111
    %p123 = scmp.eq.s32.totalorder %s17, 1
    %p124 = por %p122, %p123
    %p126 = scmp.ne.s32.totalorder %s111, %s125
    %p127 = scmp.eq.s32.totalorder %s17, 0
    %p128 = por %p126, %p127
    %s129 = ssub.s32 %s11, %s18
    %p130 = scmp.eq.s32.totalorder %s129, 0
    %s132 = sadd.s32 %s131, 1
    %s133 = scalar_select %p130, %s131, %s132
    %p136 = pneg %p130
    %p137 = scmp.eq.s32.totalorder %s11, 1
    %p138 = por %p136, %p137
    %p139 = scmp.ne.s32.totalorder %s131, %s134
    %p140 = scmp.eq.s32.totalorder %s11, 0
    %p141 = por %p139, %p140
    %p142 = scmp.ne.s32.totalorder %s131, %s134
    %p143 = scmp.eq.s32.totalorder %s16, 1
    %p144 = por %p142, %p143
    %p145 = scmp.ne.s32.totalorder %s134, %s135
    %p146 = scmp.eq.s32.totalorder %s16, 0
    %p147 = por %p145, %p146
    %p148 = scmp.ne.s32.totalorder %s134, %s135
    %p149 = scmp.eq.s32.totalorder %s17, 1
    %p150 = por %p148, %p149
    %p152 = scmp.ne.s32.totalorder %s135, %s151
    %p153 = scmp.eq.s32.totalorder %s17, 0
    %p154 = por %p152, %p153
    %p155 = scmp.le.s32.totalorder 1, %s11
    %p156 = scmp.lt.s32.totalorder %s11, 3
    %p157 = pnand %p155, %p156
    %p158 = pneg %p157
    // Predicated region
    $region9: #{tpu_custom_call.1} parent=5 // pred_check
      _
    $region10: #{tpu_custom_call.1} parent=5 // pred_check_branch
      %160 = sbr.rel (%p157) target = $region12
    $region11: #{tpu_custom_call.1} parent=5 // pred_region
      %s161 = ssub.s32 %s11, 1
      // Predicated region
      $region13: #{tpu_custom_call.1} parent=11 // pred_check
        %p162 = pneg %p58
      $region14: #{tpu_custom_call.1} parent=11 // pred_check_branch
        %164 = sbr.rel (%p162) target = $region16
      $region15: #{tpu_custom_call.1} parent=11 // pred_region
        _
      $region16: #{tpu_custom_call.1} parent=11 // pred_fallthru
        _
      // Predicated region
      $region17: #{tpu_custom_call.1} parent=11 // pred_check
        %p165 = pneg %p79
      $region18: #{tpu_custom_call.1} parent=11 // pred_check_branch
        %167 = sbr.rel (%p165) target = $region20
      $region19: #{tpu_custom_call.1} parent=11 // pred_region
        _
      $region20: #{tpu_custom_call.1} parent=11 // pred_fallthru
        _
      // Predicated region
      $region21: #{tpu_custom_call.1} parent=11 // pred_check
        %p168 = pneg %p100
      $region22: #{tpu_custom_call.1} parent=11 // pred_check_branch
        %170 = sbr.rel (%p168) target = $region24
      $region23: #{tpu_custom_call.1} parent=11 // pred_region
        _
      $region24: #{tpu_custom_call.1} parent=11 // pred_fallthru
        _
      // Predicated region
      $region25: #{tpu_custom_call.1} parent=11 // pred_check
        %p171 = pneg %p121
      $region26: #{tpu_custom_call.1} parent=11 // pred_check_branch
        %173 = sbr.rel (%p171) target = $region28
      $region27: #{tpu_custom_call.1} parent=11 // pred_region
        _
      $region28: #{tpu_custom_call.1} parent=11 // pred_fallthru
        _
    $region12: #{tpu_custom_call.1} parent=5 // pred_fallthru
      _
    %p174 = scmp.lt.s32.totalorder %s11, 2
    // Predicated region
    $region29: #{tpu_custom_call.1} parent=5 // pred_check
      %p175 = pneg %p174
    $region30: #{tpu_custom_call.1} parent=5 // pred_check_branch
      %177 = sbr.rel (%p175) target = $region32
    $region31: #{tpu_custom_call.1} parent=5 // pred_region
      // Predicated region
      $region33: #{tpu_custom_call.1} parent=31 // pred_check
        %p178 = pneg %p31
      $region34: #{tpu_custom_call.1} parent=31 // pred_check_branch
        %180 = sbr.rel (%p178) target = $region36
      $region35: #{tpu_custom_call.1} parent=31 // pred_region
        %s181 = smul.u32 16, %s11
        %p182 = scmp.lt.s32.totalorder %s181, 31
        %s183 = scalar_select %p182, %s181, 31
        %s184 = smul.addr %s183, 8
        %s185 = scalar_lea.vmem %s0, %s184
        %s186 = smul.u32 16, %s11
      $region36: #{tpu_custom_call.1} parent=31 // pred_fallthru
        _
    $region32: #{tpu_custom_call.1} parent=5 // pred_fallthru
      _
    %p187 = scmp.le.s32.totalorder 1, %s11
    %p188 = scmp.lt.s32.totalorder %s11, 3
    %p189 = pnand %p187, %p188
    %p190 = pneg %p189
    // Predicated region
    $region37: #{tpu_custom_call.1} parent=5 // pred_check
      _
    $region38: #{tpu_custom_call.1} parent=5 // pred_check_branch
      %192 = sbr.rel (%p189) target = $region40
    $region39: #{tpu_custom_call.1} parent=5 // pred_region
      %s193 = ssub.s32 %s11, 1
      %s194 = smul.u32 16, %s16
      %p195 = scmp.lt.s32.totalorder %s194, 31
      %s196 = scalar_select %p195, %s194, 31
      %s197 = smul.addr %s196, 8
      %s198 = scalar_lea.vmem %s0, %s197
      %p199 = pneg %p37
      %p200 = pneg %p34
      %p201 = pneg %p58
      %p202 = pneg %p55
      %p203 = pneg %p79
      %p204 = pneg %p76
      %p205 = pneg %p100
      %p206 = pneg %p97
      %p207 = pneg %p121
      %p208 = pneg %p118
      %p209 = pneg %p147
      %p210 = pneg %p144
      %s211 = smul.u32 16, %s16
      %p212 = scmp.lt.s32.totalorder %s211, 31
      %s213 = scalar_select %p212, %s211, 31
      %s214 = smul.addr %s213, 8
      %s215 = scalar_lea.vmem %s5, %s214
      %s216 = smul.u32 16, %s16
      %p217 = scmp.lt.s32.totalorder %s216, 31
      %s218 = scalar_select %p217, %s216, 31
      %s219 = smul.addr %s218, 8
      %s220 = scalar_lea.vmem %s0, %s219
      %s221 = smul.u32 16, %s16
      %s222 = smul.u32 16, %s16
      %p223 = scmp.lt.s32.totalorder %s222, 31
      %s224 = scalar_select %p223, %s222, 31
      %s225 = smul.addr %s224, 8
      %s226 = scalar_lea.vmem %s5, %s225
      %s227 = smul.u32 16, %s16
      %v228 = vld [vmem:[%s220] sm:$0xff]
      %v229 = vld [vmem:[%s220 + $0x8] sm:$0xff]
      %v230 = vld [vmem:[%s220 + $0x10] sm:$0xff]
      %v231 = vld [vmem:[%s220 + $0x18] sm:$0xff]
      %v232 = vld [vmem:[%s220 + $0x20] sm:$0xff]
      %v233 = vld [vmem:[%s220 + $0x28] sm:$0xff]
      %v234 = vld [vmem:[%s220 + $0x30] sm:$0xff]
      %v235 = vld [vmem:[%s220 + $0x38] sm:$0xff]
      %v236 = vld [vmem:[%s220 + $0x40] sm:$0xff]
      %v237 = vld [vmem:[%s220 + $0x48] sm:$0xff]
      %v238 = vld [vmem:[%s220 + $0x50] sm:$0xff]
      %v239 = vld [vmem:[%s220 + $0x58] sm:$0xff]
      %v240 = vld [vmem:[%s220 + $0x60] sm:$0xff]
      %v241 = vld [vmem:[%s220 + $0x68] sm:$0xff]
      %v242 = vld [vmem:[%s220 + $0x70] sm:$0xff]
      %v243 = vld [vmem:[%s220 + $0x78] sm:$0xff]
      %v244 = vld [vmem:[%s1] sm:$0xff]
      %v245 = vld [vmem:[%s1 + $0x8] sm:$0xff]
      %v246 = vld [vmem:[%s1 + $0x10] sm:$0xff]
      %v247 = vld [vmem:[%s1 + $0x18] sm:$0xff]
      %v248 = vld [vmem:[%s2] sm:$0x1]
      %v250 = vperm.slane %v248, 0
      %vm252 = vcmask 261120
      %v254 = vsel %vm252, %v228, 0
      %v257 = vsel %vm252, %v229, 0
      %v260 = vsel %vm252, %v230, 0
      %v263 = vsel %vm252, %v231, 0
      %v266 = vsel %vm252, %v232, 0
      %v269 = vsel %vm252, %v233, 0
      %v272 = vsel %vm252, %v234, 0
      %v275 = vsel %vm252, %v235, 0
      %v278 = vsel %vm252, %v236, 0
      %v281 = vsel %vm252, %v237, 0
      %v284 = vsel %vm252, %v238, 0
      %v287 = vsel %vm252, %v239, 0
      %v290 = vsel %vm252, %v240, 0
      %v293 = vsel %vm252, %v241, 0
      %v296 = vsel %vm252, %v242, 0
      %v299 = vsel %vm252, %v243, 0
      %301 = vmatpush.msra.mxu0 0.0
      %302 = vmatpush.msra.mxu0 0.0
      %303 = vmatpush.msra.mxu0 0.0
      %304 = vmatpush.msra.mxu0 0.0
      %305 = vmatpush.msra.mxu0 0.0
      %306 = vmatpush.msra.mxu0 0.0
      %307 = vmatpush.msra.mxu0 0.0
      %308 = vmatpush.msra.mxu0 0.0
      %309 = vmatpush.msra.mxu0 0.0
      %310 = vmatpush.msra.mxu0 0.0
      %311 = vmatpush.msra.mxu0 0.0
      %312 = vmatpush.msra.mxu0 0.0
      %313 = vmatpush.msra.mxu0 %v247
      %314 = vmatpush.msra.mxu0 %v246
      %315 = vmatpush.msra.mxu0 %v245
      %316 = vmatpush.msra.mxu0 %v244
      %317 = vmatmul.f32.gmra.mxu0 %v254
      %v318 = vpop.f32.mrf.mxu0
      %v319 = vadd.f32 %v250, %v318
      %320 = vmatmul.f32.gmra.mxu0 %v257
      %v321 = vpop.f32.mrf.mxu0
      %v322 = vadd.f32 %v250, %v321
      %323 = vmatmul.f32.gmra.mxu0 %v260
      %v324 = vpop.f32.mrf.mxu0
      %v325 = vadd.f32 %v250, %v324
      %326 = vmatmul.f32.gmra.mxu0 %v263
      %v327 = vpop.f32.mrf.mxu0
      %v328 = vadd.f32 %v250, %v327
      %329 = vmatmul.f32.gmra.mxu0 %v266
      %v330 = vpop.f32.mrf.mxu0
      %v331 = vadd.f32 %v250, %v330
      %332 = vmatmul.f32.gmra.mxu0 %v269
      %v333 = vpop.f32.mrf.mxu0
      %v334 = vadd.f32 %v250, %v333
      %335 = vmatmul.f32.gmra.mxu0 %v272
      %v336 = vpop.f32.mrf.mxu0
      %v337 = vadd.f32 %v250, %v336
      %338 = vmatmul.f32.gmra.mxu0 %v275
      %v339 = vpop.f32.mrf.mxu0
      %v340 = vadd.f32 %v250, %v339
      %341 = vmatmul.f32.gmra.mxu0 %v278
      %v342 = vpop.f32.mrf.mxu0
      %v343 = vadd.f32 %v250, %v342
      %344 = vmatmul.f32.gmra.mxu0 %v281
      %v345 = vpop.f32.mrf.mxu0
      %v346 = vadd.f32 %v250, %v345
      %347 = vmatmul.f32.gmra.mxu0 %v284
      %v348 = vpop.f32.mrf.mxu0
      %v349 = vadd.f32 %v250, %v348
      %350 = vmatmul.f32.gmra.mxu0 %v287
      %v351 = vpop.f32.mrf.mxu0
      %v352 = vadd.f32 %v250, %v351
      %353 = vmatmul.f32.gmra.mxu0 %v290
      %v354 = vpop.f32.mrf.mxu0
      %v355 = vadd.f32 %v250, %v354
      %356 = vmatmul.f32.gmra.mxu0 %v293
      %v357 = vpop.f32.mrf.mxu0
      %v358 = vadd.f32 %v250, %v357
      %359 = vmatmul.f32.gmra.mxu0 %v296
      %v360 = vpop.f32.mrf.mxu0
      %v361 = vadd.f32 %v250, %v360
      %362 = vmatmul.f32.gmra.mxu0 %v299
      %v363 = vpop.f32.mrf.mxu0
      %v364 = vadd.f32 %v250, %v363
      %365 = vdwg.mxu0
      %v366 = vtanh.pop %v319
      %v367 = vtanh.pop %v322
      %v368 = vtanh.pop %v325
      %v369 = vtanh.pop %v328
      %v370 = vtanh.pop %v331
      %v371 = vtanh.pop %v334
      %v372 = vtanh.pop %v337
      %v373 = vtanh.pop %v340
      %v374 = vtanh.pop %v343
      %v375 = vtanh.pop %v346
      %v376 = vtanh.pop %v349
      %v377 = vtanh.pop %v352
      %v378 = vtanh.pop %v355
      %v379 = vtanh.pop %v358
      %v380 = vtanh.pop %v361
      %v381 = vtanh.pop %v364
      %v382 = vld [vmem:[%s3] sm:$0xff]
      %v383 = vld [vmem:[%s3 + $0x8] sm:$0xff]
      %v384 = vld [vmem:[%s3 + $0x10] sm:$0xff]
      %v385 = vld [vmem:[%s3 + $0x18] sm:$0xff]
      %v386 = vld [vmem:[%s3 + $0x20] sm:$0xff]
      %v387 = vld [vmem:[%s3 + $0x28] sm:$0xff]
      %v388 = vld [vmem:[%s3 + $0x30] sm:$0x3]
      %v389 = vld [vmem:[%s4] sm:$0x1]
      %v391 = vperm.slane %v389, 0
      %vm393 = vcmask 408576
      %v395 = vsel %vm393, %v366, 0
      %v398 = vsel %vm393, %v367, 0
      %v401 = vsel %vm393, %v368, 0
      %v404 = vsel %vm393, %v369, 0
      %v407 = vsel %vm393, %v370, 0
      %v410 = vsel %vm393, %v371, 0
      %v413 = vsel %vm393, %v372, 0
      %v416 = vsel %vm393, %v373, 0
      %v419 = vsel %vm393, %v374, 0
      %v422 = vsel %vm393, %v375, 0
      %v425 = vsel %vm393, %v376, 0
      %v428 = vsel %vm393, %v377, 0
      %v431 = vsel %vm393, %v378, 0
      %v434 = vsel %vm393, %v379, 0
      %v437 = vsel %vm393, %v380, 0
      %v440 = vsel %vm393, %v381, 0
      %vm442 = vcmask 1041408
      %v444 = vsel %vm442, %v388, 0
      %446 = vmatpush.msra.mxu0 0.0
      %447 = vmatpush.msra.mxu0 0.0
      %448 = vmatpush.msra.mxu0 0.0
      %449 = vmatpush.msra.mxu0 0.0
      %450 = vmatpush.msra.mxu0 0.0
      %451 = vmatpush.msra.mxu0 0.0
      %452 = vmatpush.msra.mxu0 0.0
      %453 = vmatpush.msra.mxu0 0.0
      %454 = vmatpush.msra.mxu0 0.0
      %455 = vmatpush.msra.mxu0 %v444
      %456 = vmatpush.msra.mxu0 %v387
      %457 = vmatpush.msra.mxu0 %v386
      %458 = vmatpush.msra.mxu0 %v385
      %459 = vmatpush.msra.mxu0 %v384
      %460 = vmatpush.msra.mxu0 %v383
      %461 = vmatpush.msra.mxu0 %v382
      %462 = vmatmul.f32.gmra.mxu0 %v395
      %v463 = vpop.f32.mrf.mxu0
      %v464 = vadd.f32 %v391, %v463
      %465 = vmatmul.f32.gmra.mxu0 %v398
      %v466 = vpop.f32.mrf.mxu0
      %v467 = vadd.f32 %v391, %v466
      %468 = vmatmul.f32.gmra.mxu0 %v401
      %v469 = vpop.f32.mrf.mxu0
      %v470 = vadd.f32 %v391, %v469
      %471 = vmatmul.f32.gmra.mxu0 %v404
      %v472 = vpop.f32.mrf.mxu0
      %v473 = vadd.f32 %v391, %v472
      %474 = vmatmul.f32.gmra.mxu0 %v407
      %v475 = vpop.f32.mrf.mxu0
      %v476 = vadd.f32 %v391, %v475
      %477 = vmatmul.f32.gmra.mxu0 %v410
      %v478 = vpop.f32.mrf.mxu0
      %v479 = vadd.f32 %v391, %v478
      %480 = vmatmul.f32.gmra.mxu0 %v413
      %v481 = vpop.f32.mrf.mxu0
      %v482 = vadd.f32 %v391, %v481
      %483 = vmatmul.f32.gmra.mxu0 %v416
      %v484 = vpop.f32.mrf.mxu0
      %v485 = vadd.f32 %v391, %v484
      %486 = vmatmul.f32.gmra.mxu0 %v419
      %v487 = vpop.f32.mrf.mxu0
      %v488 = vadd.f32 %v391, %v487
      %489 = vmatmul.f32.gmra.mxu0 %v422
      %v490 = vpop.f32.mrf.mxu0
      %v491 = vadd.f32 %v391, %v490
      %492 = vmatmul.f32.gmra.mxu0 %v425
      %v493 = vpop.f32.mrf.mxu0
      %v494 = vadd.f32 %v391, %v493
      %495 = vmatmul.f32.gmra.mxu0 %v428
      %v496 = vpop.f32.mrf.mxu0
      %v497 = vadd.f32 %v391, %v496
      %498 = vmatmul.f32.gmra.mxu0 %v431
      %v499 = vpop.f32.mrf.mxu0
      %v500 = vadd.f32 %v391, %v499
      %501 = vmatmul.f32.gmra.mxu0 %v434
      %v502 = vpop.f32.mrf.mxu0
      %v503 = vadd.f32 %v391, %v502
      %504 = vmatmul.f32.gmra.mxu0 %v437
      %v505 = vpop.f32.mrf.mxu0
      %v506 = vadd.f32 %v391, %v505
      %507 = vmatmul.f32.gmra.mxu0 %v440
      %v508 = vpop.f32.mrf.mxu0
      %v509 = vadd.f32 %v391, %v508
      %510 = vdwg.mxu0
      %vm511 = vcmask 80896
      %v512 = vsel %vm511, %v464, -inf
      %513 = vmax.xlane.f32.xlu0 %v512
      %v514 = vpop.xlane.xlu0 %513
      %v515 = vsel %vm511, %v467, -inf
      %516 = vmax.xlane.f32.xlu0 %v515
      %v517 = vpop.xlane.xlu0 %516
      %v518 = vsel %vm511, %v470, -inf
      %519 = vmax.xlane.f32.xlu0 %v518
      %v520 = vpop.xlane.xlu0 %519
      %v521 = vsel %vm511, %v473, -inf
      %522 = vmax.xlane.f32.xlu0 %v521
      %v523 = vpop.xlane.xlu0 %522
      %v524 = vsel %vm511, %v476, -inf
      %525 = vmax.xlane.f32.xlu0 %v524
      %v526 = vpop.xlane.xlu0 %525
      %v527 = vsel %vm511, %v479, -inf
      %528 = vmax.xlane.f32.xlu0 %v527
      %v529 = vpop.xlane.xlu0 %528
      %v530 = vsel %vm511, %v482, -inf
      %531 = vmax.xlane.f32.xlu0 %v530
      %v532 = vpop.xlane.xlu0 %531
      %v533 = vsel %vm511, %v485, -inf
      %534 = vmax.xlane.f32.xlu0 %v533
      %v535 = vpop.xlane.xlu0 %534
      %v536 = vsel %vm511, %v488, -inf
      %537 = vmax.xlane.f32.xlu0 %v536
      %v538 = vpop.xlane.xlu0 %537
      %v539 = vsel %vm511, %v491, -inf
      %540 = vmax.xlane.f32.xlu0 %v539
      %v541 = vpop.xlane.xlu0 %540
      %v542 = vsel %vm511, %v494, -inf
      %543 = vmax.xlane.f32.xlu0 %v542
      %v544 = vpop.xlane.xlu0 %543
      %v545 = vsel %vm511, %v497, -inf
      %546 = vmax.xlane.f32.xlu0 %v545
      %v547 = vpop.xlane.xlu0 %546
      %v548 = vsel %vm511, %v500, -inf
      %549 = vmax.xlane.f32.xlu0 %v548
      %v550 = vpop.xlane.xlu0 %549
      %v551 = vsel %vm511, %v503, -inf
      %552 = vmax.xlane.f32.xlu0 %v551
      %v553 = vpop.xlane.xlu0 %552
      %v554 = vsel %vm511, %v506, -inf
      %555 = vmax.xlane.f32.xlu0 %v554
      %v556 = vpop.xlane.xlu0 %555
      %v557 = vsel %vm511, %v509, -inf
      %558 = vmax.xlane.f32.xlu0 %v557
      %v559 = vpop.xlane.xlu0 %558
      %v560 = vsub.f32 %v464, %v514
      %v561 = vsub.f32 %v467, %v517
      %v562 = vsub.f32 %v470, %v520
      %v563 = vsub.f32 %v473, %v523
      %v564 = vsub.f32 %v476, %v526
      %v565 = vsub.f32 %v479, %v529
      %v566 = vsub.f32 %v482, %v532
      %v567 = vsub.f32 %v485, %v535
      %v568 = vsub.f32 %v488, %v538
      %v569 = vsub.f32 %v491, %v541
      %v570 = vsub.f32 %v494, %v544
      %v571 = vsub.f32 %v497, %v547
      %v572 = vsub.f32 %v500, %v550
      %v573 = vsub.f32 %v503, %v553
      %v574 = vsub.f32 %v506, %v556
      %v575 = vsub.f32 %v509, %v559
      %v576 = vmul.f32 %v560, 1.442695
      %v577 = vpow.pop %v576
      %v578 = vmul.f32 %v561, 1.442695
      %v579 = vpow.pop %v578
      %v580 = vmul.f32 %v562, 1.442695
      %v581 = vpow.pop %v580
      %v582 = vmul.f32 %v563, 1.442695
      %v583 = vpow.pop %v582
      %v584 = vmul.f32 %v564, 1.442695
      %v585 = vpow.pop %v584
      %v586 = vmul.f32 %v565, 1.442695
      %v587 = vpow.pop %v586
      %v588 = vmul.f32 %v566, 1.442695
      %v589 = vpow.pop %v588
      %v590 = vmul.f32 %v567, 1.442695
      %v591 = vpow.pop %v590
      %v592 = vmul.f32 %v568, 1.442695
      %v593 = vpow.pop %v592
      %v594 = vmul.f32 %v569, 1.442695
      %v595 = vpow.pop %v594
      %v596 = vmul.f32 %v570, 1.442695
      %v597 = vpow.pop %v596
      %v598 = vmul.f32 %v571, 1.442695
      %v599 = vpow.pop %v598
      %v600 = vmul.f32 %v572, 1.442695
      %v601 = vpow.pop %v600
      %v602 = vmul.f32 %v573, 1.442695
      %v603 = vpow.pop %v602
      %v604 = vmul.f32 %v574, 1.442695
      %v605 = vpow.pop %v604
      %v606 = vmul.f32 %v575, 1.442695
      %v607 = vpow.pop %v606
      %v608 = vsel %vm511, %v577, 0.0
      %609 = vadd.xlane.f32.xlu0 %v608
      %v610 = vpop.xlane.xlu0 %609
      %v611 = vsel %vm511, %v579, 0.0
      %612 = vadd.xlane.f32.xlu0 %v611
      %v613 = vpop.xlane.xlu0 %612
      %v614 = vsel %vm511, %v581, 0.0
      %615 = vadd.xlane.f32.xlu0 %v614
      %v616 = vpop.xlane.xlu0 %615
      %v617 = vsel %vm511, %v583, 0.0
      %618 = vadd.xlane.f32.xlu0 %v617
      %v619 = vpop.xlane.xlu0 %618
      %v620 = vsel %vm511, %v585, 0.0
      %621 = vadd.xlane.f32.xlu0 %v620
      %v622 = vpop.xlane.xlu0 %621
      %v623 = vsel %vm511, %v587, 0.0
      %624 = vadd.xlane.f32.xlu0 %v623
      %v625 = vpop.xlane.xlu0 %624
      %v626 = vsel %vm511, %v589, 0.0
      %627 = vadd.xlane.f32.xlu0 %v626
      %v628 = vpop.xlane.xlu0 %627
      %v629 = vsel %vm511, %v591, 0.0
      %630 = vadd.xlane.f32.xlu0 %v629
      %v631 = vpop.xlane.xlu0 %630
      %v632 = vsel %vm511, %v593, 0.0
      %633 = vadd.xlane.f32.xlu0 %v632
      %v634 = vpop.xlane.xlu0 %633
      %v635 = vsel %vm511, %v595, 0.0
      %636 = vadd.xlane.f32.xlu0 %v635
      %v637 = vpop.xlane.xlu0 %636
      %v638 = vsel %vm511, %v597, 0.0
      %639 = vadd.xlane.f32.xlu0 %v638
      %v640 = vpop.xlane.xlu0 %639
      %v641 = vsel %vm511, %v599, 0.0
      %642 = vadd.xlane.f32.xlu0 %v641
      %v643 = vpop.xlane.xlu0 %642
      %v644 = vsel %vm511, %v601, 0.0
      %645 = vadd.xlane.f32.xlu0 %v644
      %v646 = vpop.xlane.xlu0 %645
      %v647 = vsel %vm511, %v603, 0.0
      %648 = vadd.xlane.f32.xlu0 %v647
      %v649 = vpop.xlane.xlu0 %648
      %v650 = vsel %vm511, %v605, 0.0
      %651 = vadd.xlane.f32.xlu0 %v650
      %v652 = vpop.xlane.xlu0 %651
      %v653 = vsel %vm511, %v607, 0.0
      %654 = vadd.xlane.f32.xlu0 %v653
      %v655 = vpop.xlane.xlu0 %654
      %v656 = vrcp.pop %v610
      %v657 = vmul.f32 %v610, %v656
      %v658 = vsub.f32 1.0, %v657
      %v659 = vmul.f32 %v656, %v658
      %v660 = vadd.f32 %v656, %v659
      %vm661 = vweird.f32 %v610
      %vm662 = vweird.f32 %v656
      %vm663 = vmor %vm661, %vm662
      %v664 = vsel %vm663, %v656, %v660
      %v665 = vand.u32 2147483647, %v610
      %vm666 = vcmp.eq.f32.partialorder %v665, 8.507059e+37
      %v667 = vand.u32 %v610, 2147483648
      %v668 = vor.u32 1.1754944e-38, %v667
      %v669 = vsel %vm666, %v668, %v664
      %v670 = vmul.f32 %v577, %v669
      %v671 = vrcp.pop %v613
      %v672 = vmul.f32 %v613, %v671
      %v673 = vsub.f32 1.0, %v672
      %v674 = vmul.f32 %v671, %v673
      %v675 = vadd.f32 %v671, %v674
      %vm676 = vweird.f32 %v613
      %vm677 = vweird.f32 %v671
      %vm678 = vmor %vm676, %vm677
      %v679 = vsel %vm678, %v671, %v675
      %v680 = vand.u32 2147483647, %v613
      %vm681 = vcmp.eq.f32.partialorder %v680, 8.507059e+37
      %v682 = vand.u32 %v613, 2147483648
      %v683 = vor.u32 1.1754944e-38, %v682
      %v684 = vsel %vm681, %v683, %v679
      %v685 = vmul.f32 %v579, %v684
      %v686 = vrcp.pop %v616
      %v687 = vmul.f32 %v616, %v686
      %v688 = vsub.f32 1.0, %v687
      %v689 = vmul.f32 %v686, %v688
      %v690 = vadd.f32 %v686, %v689
      %vm691 = vweird.f32 %v616
      %vm692 = vweird.f32 %v686
      %vm693 = vmor %vm691, %vm692
      %v694 = vsel %vm693, %v686, %v690
      %v695 = vand.u32 2147483647, %v616
      %vm696 = vcmp.eq.f32.partialorder %v695, 8.507059e+37
      %v697 = vand.u32 %v616, 2147483648
      %v698 = vor.u32 1.1754944e-38, %v697
      %v699 = vsel %vm696, %v698, %v694
      %v700 = vmul.f32 %v581, %v699
      %v701 = vrcp.pop %v619
      %v702 = vmul.f32 %v619, %v701
      %v703 = vsub.f32 1.0, %v702
      %v704 = vmul.f32 %v701, %v703
      %v705 = vadd.f32 %v701, %v704
      %vm706 = vweird.f32 %v619
      %vm707 = vweird.f32 %v701
      %vm708 = vmor %vm706, %vm707
      %v709 = vsel %vm708, %v701, %v705
      %v710 = vand.u32 2147483647, %v619
      %vm711 = vcmp.eq.f32.partialorder %v710, 8.507059e+37
      %v712 = vand.u32 %v619, 2147483648
      %v713 = vor.u32 1.1754944e-38, %v712
      %v714 = vsel %vm711, %v713, %v709
      %v715 = vmul.f32 %v583, %v714
      %v716 = vrcp.pop %v622
      %v717 = vmul.f32 %v622, %v716
      %v718 = vsub.f32 1.0, %v717
      %v719 = vmul.f32 %v716, %v718
      %v720 = vadd.f32 %v716, %v719
      %vm721 = vweird.f32 %v622
      %vm722 = vweird.f32 %v716
      %vm723 = vmor %vm721, %vm722
      %v724 = vsel %vm723, %v716, %v720
      %v725 = vand.u32 2147483647, %v622
      %vm726 = vcmp.eq.f32.partialorder %v725, 8.507059e+37
      %v727 = vand.u32 %v622, 2147483648
      %v728 = vor.u32 1.1754944e-38, %v727
      %v729 = vsel %vm726, %v728, %v724
      %v730 = vmul.f32 %v585, %v729
      %v731 = vrcp.pop %v625
      %v732 = vmul.f32 %v625, %v731
      %v733 = vsub.f32 1.0, %v732
      %v734 = vmul.f32 %v731, %v733
      %v735 = vadd.f32 %v731, %v734
      %vm736 = vweird.f32 %v625
      %vm737 = vweird.f32 %v731
      %vm738 = vmor %vm736, %vm737
      %v739 = vsel %vm738, %v731, %v735
      %v740 = vand.u32 2147483647, %v625
      %vm741 = vcmp.eq.f32.partialorder %v740, 8.507059e+37
      %v742 = vand.u32 %v625, 2147483648
      %v743 = vor.u32 1.1754944e-38, %v742
      %v744 = vsel %vm741, %v743, %v739
      %v745 = vmul.f32 %v587, %v744
      %v746 = vrcp.pop %v628
      %v747 = vmul.f32 %v628, %v746
      %v748 = vsub.f32 1.0, %v747
      %v749 = vmul.f32 %v746, %v748
      %v750 = vadd.f32 %v746, %v749
      %vm751 = vweird.f32 %v628
      %vm752 = vweird.f32 %v746
      %vm753 = vmor %vm751, %vm752
      %v754 = vsel %vm753, %v746, %v750
      %v755 = vand.u32 2147483647, %v628
      %vm756 = vcmp.eq.f32.partialorder %v755, 8.507059e+37
      %v757 = vand.u32 %v628, 2147483648
      %v758 = vor.u32 1.1754944e-38, %v757
      %v759 = vsel %vm756, %v758, %v754
      %v760 = vmul.f32 %v589, %v759
      %v761 = vrcp.pop %v631
      %v762 = vmul.f32 %v631, %v761
      %v763 = vsub.f32 1.0, %v762
      %v764 = vmul.f32 %v761, %v763
      %v765 = vadd.f32 %v761, %v764
      %vm766 = vweird.f32 %v631
      %vm767 = vweird.f32 %v761
      %vm768 = vmor %vm766, %vm767
      %v769 = vsel %vm768, %v761, %v765
      %v770 = vand.u32 2147483647, %v631
      %vm771 = vcmp.eq.f32.partialorder %v770, 8.507059e+37
      %v772 = vand.u32 %v631, 2147483648
      %v773 = vor.u32 1.1754944e-38, %v772
      %v774 = vsel %vm771, %v773, %v769
      %v775 = vmul.f32 %v591, %v774
      %v776 = vrcp.pop %v634
      %v777 = vmul.f32 %v634, %v776
      %v778 = vsub.f32 1.0, %v777
      %v779 = vmul.f32 %v776, %v778
      %v780 = vadd.f32 %v776, %v779
      %vm781 = vweird.f32 %v634
      %vm782 = vweird.f32 %v776
      %vm783 = vmor %vm781, %vm782
      %v784 = vsel %vm783, %v776, %v780
      %v785 = vand.u32 2147483647, %v634
      %vm786 = vcmp.eq.f32.partialorder %v785, 8.507059e+37
      %v787 = vand.u32 %v634, 2147483648
      %v788 = vor.u32 1.1754944e-38, %v787
      %v789 = vsel %vm786, %v788, %v784
      %v790 = vmul.f32 %v593, %v789
      %v791 = vrcp.pop %v637
      %v792 = vmul.f32 %v637, %v791
      %v793 = vsub.f32 1.0, %v792
      %v794 = vmul.f32 %v791, %v793
      %v795 = vadd.f32 %v791, %v794
      %vm796 = vweird.f32 %v637
      %vm797 = vweird.f32 %v791
      %vm798 = vmor %vm796, %vm797
      %v799 = vsel %vm798, %v791, %v795
      %v800 = vand.u32 2147483647, %v637
      %vm801 = vcmp.eq.f32.partialorder %v800, 8.507059e+37
      %v802 = vand.u32 %v637, 2147483648
      %v803 = vor.u32 1.1754944e-38, %v802
      %v804 = vsel %vm801, %v803, %v799
      %v805 = vmul.f32 %v595, %v804
      %v806 = vrcp.pop %v640
      %v807 = vmul.f32 %v640, %v806
      %v808 = vsub.f32 1.0, %v807
      %v809 = vmul.f32 %v806, %v808
      %v810 = vadd.f32 %v806, %v809
      %vm811 = vweird.f32 %v640
      %vm812 = vweird.f32 %v806
      %vm813 = vmor %vm811, %vm812
      %v814 = vsel %vm813, %v806, %v810
      %v815 = vand.u32 2147483647, %v640
      %vm816 = vcmp.eq.f32.partialorder %v815, 8.507059e+37
      %v817 = vand.u32 %v640, 2147483648
      %v818 = vor.u32 1.1754944e-38, %v817
      %v819 = vsel %vm816, %v818, %v814
      %v820 = vmul.f32 %v597, %v819
      %v821 = vrcp.pop %v643
      %v822 = vmul.f32 %v643, %v821
      %v823 = vsub.f32 1.0, %v822
      %v824 = vmul.f32 %v821, %v823
      %v825 = vadd.f32 %v821, %v824
      %vm826 = vweird.f32 %v643
      %vm827 = vweird.f32 %v821
      %vm828 = vmor %vm826, %vm827
      %v829 = vsel %vm828, %v821, %v825
      %v830 = vand.u32 2147483647, %v643
      %vm831 = vcmp.eq.f32.partialorder %v830, 8.507059e+37
      %v832 = vand.u32 %v643, 2147483648
      %v833 = vor.u32 1.1754944e-38, %v832
      %v834 = vsel %vm831, %v833, %v829
      %v835 = vmul.f32 %v599, %v834
      %v836 = vrcp.pop %v646
      %v837 = vmul.f32 %v646, %v836
      %v838 = vsub.f32 1.0, %v837
      %v839 = vmul.f32 %v836, %v838
      %v840 = vadd.f32 %v836, %v839
      %vm841 = vweird.f32 %v646
      %vm842 = vweird.f32 %v836
      %vm843 = vmor %vm841, %vm842
      %v844 = vsel %vm843, %v836, %v840
      %v845 = vand.u32 2147483647, %v646
      %vm846 = vcmp.eq.f32.partialorder %v845, 8.507059e+37
      %v847 = vand.u32 %v646, 2147483648
      %v848 = vor.u32 1.1754944e-38, %v847
      %v849 = vsel %vm846, %v848, %v844
      %v850 = vmul.f32 %v601, %v849
      %v851 = vrcp.pop %v649
      %v852 = vmul.f32 %v649, %v851
      %v853 = vsub.f32 1.0, %v852
      %v854 = vmul.f32 %v851, %v853
      %v855 = vadd.f32 %v851, %v854
      %vm856 = vweird.f32 %v649
      %vm857 = vweird.f32 %v851
      %vm858 = vmor %vm856, %vm857
      %v859 = vsel %vm858, %v851, %v855
      %v860 = vand.u32 2147483647, %v649
      %vm861 = vcmp.eq.f32.partialorder %v860, 8.507059e+37
      %v862 = vand.u32 %v649, 2147483648
      %v863 = vor.u32 1.1754944e-38, %v862
      %v864 = vsel %vm861, %v863, %v859
      %v865 = vmul.f32 %v603, %v864
      %v866 = vrcp.pop %v652
      %v867 = vmul.f32 %v652, %v866
      %v868 = vsub.f32 1.0, %v867
      %v869 = vmul.f32 %v866, %v868
      %v870 = vadd.f32 %v866, %v869
      %vm871 = vweird.f32 %v652
      %vm872 = vweird.f32 %v866
      %vm873 = vmor %vm871, %vm872
      %v874 = vsel %vm873, %v866, %v870
      %v875 = vand.u32 2147483647, %v652
      %vm876 = vcmp.eq.f32.partialorder %v875, 8.507059e+37
      %v877 = vand.u32 %v652, 2147483648
      %v878 = vor.u32 1.1754944e-38, %v877
      %v879 = vsel %vm876, %v878, %v874
      %v880 = vmul.f32 %v605, %v879
      %v881 = vrcp.pop %v655
      %v882 = vmul.f32 %v655, %v881
      %v883 = vsub.f32 1.0, %v882
      %v884 = vmul.f32 %v881, %v883
      %v885 = vadd.f32 %v881, %v884
      %vm886 = vweird.f32 %v655
      %vm887 = vweird.f32 %v881
      %vm888 = vmor %vm886, %vm887
      %v889 = vsel %vm888, %v881, %v885
      %v890 = vand.u32 2147483647, %v655
      %vm891 = vcmp.eq.f32.partialorder %v890, 8.507059e+37
      %v892 = vand.u32 %v655, 2147483648
      %v893 = vor.u32 1.1754944e-38, %v892
      %v894 = vsel %vm891, %v893, %v889
      %v895 = vmul.f32 %v607, %v894
      %896 = vst.msk [vmem:[%s226] sm:$0xff] %vm511, %v670
      %897 = vst.msk [vmem:[%s226 + $0x8] sm:$0xff] %vm511, %v685
      %898 = vst.msk [vmem:[%s226 + $0x10] sm:$0xff] %vm511, %v700
      %899 = vst.msk [vmem:[%s226 + $0x18] sm:$0xff] %vm511, %v715
      %900 = vst.msk [vmem:[%s226 + $0x20] sm:$0xff] %vm511, %v730
      %901 = vst.msk [vmem:[%s226 + $0x28] sm:$0xff] %vm511, %v745
      %902 = vst.msk [vmem:[%s226 + $0x30] sm:$0xff] %vm511, %v760
      %903 = vst.msk [vmem:[%s226 + $0x38] sm:$0xff] %vm511, %v775
      %904 = vst.msk [vmem:[%s226 + $0x40] sm:$0xff] %vm511, %v790
      %905 = vst.msk [vmem:[%s226 + $0x48] sm:$0xff] %vm511, %v805
      %906 = vst.msk [vmem:[%s226 + $0x50] sm:$0xff] %vm511, %v820
      %907 = vst.msk [vmem:[%s226 + $0x58] sm:$0xff] %vm511, %v835
      %908 = vst.msk [vmem:[%s226 + $0x60] sm:$0xff] %vm511, %v850
      %909 = vst.msk [vmem:[%s226 + $0x68] sm:$0xff] %vm511, %v865
      %910 = vst.msk [vmem:[%s226 + $0x70] sm:$0xff] %vm511, %v880
      %911 = vst.msk [vmem:[%s226 + $0x78] sm:$0xff] %vm511, %v895
      %s912 = smul.u32 16, %s16
      %p913 = scmp.lt.s32.totalorder %s912, 31
      %s914 = scalar_select %p913, %s912, 31
      %s915 = smul.addr %s914, 8
      %s916 = scalar_lea.vmem %s5, %s915
      // Predicated region
      $region41: #{tpu_custom_call.1} parent=39 // pred_check
        %p917 = pneg %p144
      $region42: #{tpu_custom_call.1} parent=39 // pred_check_branch
        %919 = sbr.rel (%p917) target = $region44
      $region43: #{tpu_custom_call.1} parent=39 // pred_region
        %s920 = smul.u32 16, %s16
      $region44: #{tpu_custom_call.1} parent=39 // pred_fallthru
        _
    $region40: #{tpu_custom_call.1} parent=5 // pred_fallthru
      _
    %p921 = scmp.le.s32.totalorder 2, %s11
    // Predicated region
    $region45: #{tpu_custom_call.1} parent=5 // pred_check
      %p922 = pneg %p921
    $region46: #{tpu_custom_call.1} parent=5 // pred_check_branch
      %924 = sbr.rel (%p922) target = $region48
    $region47: #{tpu_custom_call.1} parent=5 // pred_region
      %s925 = ssub.s32 %s11, 2
      // Predicated region
      $region49: #{tpu_custom_call.1} parent=47 // pred_check
        %p926 = pneg %p150
      $region50: #{tpu_custom_call.1} parent=47 // pred_check_branch
        %928 = sbr.rel (%p926) target = $region52
      $region51: #{tpu_custom_call.1} parent=47 // pred_region
        %s929 = smul.u32 16, %s17
        %p930 = scmp.lt.s32.totalorder %s929, 31
        %s931 = scalar_select %p930, %s929, 31
        %s932 = smul.addr %s931, 8
        %s933 = scalar_lea.vmem %s5, %s932
      $region52: #{tpu_custom_call.1} parent=47 // pred_fallthru
        _
    $region48: #{tpu_custom_call.1} parent=5 // pred_fallthru
      _
  $region6: #{tpu_custom_call.1} parent=0 // loop_footer
    %s15 = sadd.s32 1, %s11
  $region7: #{tpu_custom_call.1} parent=0 // loop_footer_branch
    %10 = sbr.rel target = $region3
  $region8: #{tpu_custom_call.1} parent=0 // loop_exit
    _

</llo_original>
